<compile_context>
chip_gen: v7x
topology: tpu7x:2x2x1
jax: 0.10.0
libtpu: 0.0.40
codegen_flags: <defaults>
</compile_context>

<pallas_src>
import jax
import jax.numpy as jnp
from jax.experimental import pallas as pl
from jax.experimental.pallas import tpu as pltpu


def _copy_kernel(x_ref, o_ref):
    # Pure whole-tile copy: lane-dense in and out, no relayout, no masking.
    o_ref[...] = x_ref[...]


def _pick_rows_tile(rows, row_bytes, budget_bytes=4 << 20):
    """Largest row tile that (a) is a multiple of 8 and divides `rows`, and
    (b) keeps one block under ~4 MiB (VMEM-safe with double buffering on all
    of v5e/v6e/v7x).  Falls back to the full row extent when rows is not a
    multiple of 8 (a block equal to the full array dim is always legal)."""
    if rows % 8 != 0 or rows * row_bytes <= budget_bytes:
        return rows
    max_rows = max(8, (budget_bytes // max(row_bytes, 1)) // 8 * 8)
    t = min(rows, max_rows)
    while rows % t != 0:
        t -= 8
    return max(t, 8)


def _merged_copy(x2):
    """Pallas copy of a flattened, lane-dense [rows, cols] slab."""
    rows, cols = x2.shape
    row_bytes = cols * x2.dtype.itemsize
    rows_tile = _pick_rows_tile(rows, row_bytes)
    grid = (rows // rows_tile,)
    return pl.pallas_call(
        _copy_kernel,
        out_shape=jax.ShapeDtypeStruct((rows, cols), x2.dtype),
        grid=grid,
        in_specs=[pl.BlockSpec((rows_tile, cols), lambda i: (i, 0))],
        out_specs=pl.BlockSpec((rows_tile, cols), lambda i: (i, 0)),
        compiler_params=pltpu.CompilerParams(
            dimension_semantics=("parallel",)
        ),
    )(x2)


def concat_forward(*args, dim=-2):
    """JAX/Pallas equivalent of Concat(dim).forward(*args)."""
    assert len(args) > 0, "Expected at least one input tensor"
    x = args[-1]
    shape = list(x.shape)
    d = dim
    if d < 0:
        d += len(shape)

    view_shape = shape[:d] + [shape[d] * shape[d + 1]] + shape[d + 2:]

    if x.ndim == 4 and d == x.ndim - 2:
        B, C, H, W = x.shape
        # Free metadata reshape to a lane-dense 2-D slab before the kernel;
        # the kernel itself is a pure unmasked copy.
        x2 = jnp.reshape(x, (B * C, H * W))
        y2 = _merged_copy(x2)
        x_view = jnp.reshape(y2, (B, C, H * W))
        # TODO(synk): in production this whole branch should just be
        # jnp.reshape(x, (B, C, H*W)) — a zero-cost view with no HBM traffic.
    else:
        # Generic (dim != -2 or non-4D) case: pure metadata reshape.
        x_view = jnp.reshape(x, view_shape)

    if len(args) > 1:
        return args[:-1] + (x_view,)
    return x_view


if __name__ == "__main__":
    key = jax.random.PRNGKey(0)
    k1, k2 = jax.random.split(key)

    # Small shapes consistent with the module's use (NCHW feature map).
    x = jax.random.normal(k1, (2, 4, 16, 16), dtype=jnp.float32)
    extra = jax.random.normal(k2, (2, 8), dtype=jnp.float32)  # passthrough arg

    # Single-arg path
    out = concat_forward(x)
    out = jax.block_until_ready(out)
    assert out.shape == (2, 4, 256), out.shape
    ref = jnp.reshape(x, (2, 4, 256))
    assert jnp.array_equal(out, ref)

    # Multi-arg path: preceding args returned unchanged.
    outs = concat_forward(extra, x)
    outs = jax.block_until_ready(outs)
    assert isinstance(outs, tuple) and len(outs) == 2
    assert outs[0].shape == (2, 8) and jnp.array_equal(outs[0], extra)
    assert outs[1].shape == (2, 4, 256) and jnp.array_equal(outs[1], ref)

    print("KERNEL_OK")
</pallas_src>

<mosaic_0001>
module attributes {stable_mosaic.version = 11 : i64} {
  func.func @_copy_kernel(%arg0: i32, %arg1: memref<8x256xf32, #tpu.memory_space<vmem>>, %arg2: memref<8x256xf32, #tpu.memory_space<vmem>>) attributes {dimension_semantics = [#tpu.dimension_semantics<parallel>], iteration_bounds = array<i64: 1>, scalar_prefetch = 0 : i64, scratch_operands = 0 : i64, tpu.core_type = #tpu.core_type<tc>, window_params = [{transform_indices = @transform_0, window_bounds = array<i64: 8, 256>}, {transform_indices = @transform_1, window_bounds = array<i64: 8, 256>}]} {
    %c0 = arith.constant 0 : index
    %c0_0 = arith.constant 0 : index
    %0 = vector.load %arg1[%c0, %c0_0] : memref<8x256xf32, #tpu.memory_space<vmem>>, vector<8x256xf32>
    %c0_1 = arith.constant 0 : index
    %c0_2 = arith.constant 0 : index
    %1 = vector.load %arg2[%c0_1, %c0_2] : memref<8x256xf32, #tpu.memory_space<vmem>>, vector<8x256xf32>
    tpu.vector_store %arg2[%c0_1, %c0_2], %0 {strides = array<i32>} : memref<8x256xf32, #tpu.memory_space<vmem>>, vector<8x256xf32>,
    return
  }
  func.func @transform_0(%arg0: i32) -> (i32, i32) {
    %c0_i32 = arith.constant 0 : i32
    %c0_i32_0 = arith.constant 0 : i32
    return %arg0, %c0_i32 : i32, i32
  }
  func.func @transform_1(%arg0: i32) -> (i32, i32) {
    %c0_i32 = arith.constant 0 : i32
    %c0_i32_0 = arith.constant 0 : i32
    return %arg0, %c0_i32 : i32, i32
  }
}

</mosaic_0001>

<llo_original>
// kernel: tpu_custom_call.1
$region0: #{tpu_custom_call.1}
  #allocation0 [shape = 'u32[]', space=smem, size = 0x4, offset = 0x4, fixed_abs, tag = 'smem constant byte address 0x4 - core index']
  #allocation1 [shape = 'u32[144,128]{1,0:T(1,128)}', space=vmem, size = 0x12000, scoped, tag = 'internal scratch']
  %s0 = inlined_call_operand.hbm [shape: f32[8,256], index: 0, kind: input, shape index: {}]
  %s1 = inlined_call_operand.hbm [shape: f32[8,256], index: 1, kind: output, shape index: {}]
  %s2 = sld [smem:[#allocation0]]
  $region18: #{tpu_custom_call.1} parent=0
    _
  %s4 = ssub.s32 1, %s2
  %s5 = scalar_select 0, %s4, %s2
  $region1: #{tpu_custom_call.1} parent=0
    #allocation2 [shape = 'u8[8192]{0}', space=vmem, size = 0x2000, scoped, tag = 'input window, operand 0, single buffered']
    #allocation3 [shape = 's32[1]{0}', space=sflag, size = 0x4, scoped, tag = 'scoped memory for tpu_custom_call.1']
    #allocation4 [shape = 's32[1]{0}', space=sflag, size = 0x4, scoped, tag = 'scoped memory for tpu_custom_call.1']
    #allocation5 [shape = 'u8[8192]{0}', space=vmem, size = 0x2000, scoped, tag = 'output window, operand 0, single buffered']
    %6 = vsyncpa [#allocation3], 0
    %7 = vsyncpa [#allocation4], 0
    // Predicated region
    $region2: #{tpu_custom_call.1} parent=1 // pred_check
      _
    $region3: #{tpu_custom_call.1} parent=1 // pred_check_branch
      %9 = sbr.rel (0) target = $region5
    $region4: #{tpu_custom_call.1} parent=1 // pred_region
      %s11 = ssub.s32 256, 256
      %12 = vsyncadd [#allocation3], %s11
      %s14 = sshll.u32 [#allocation2], 4
      %s15 = int_to_ptr.vmem [resolvable:$true] %s14
      %17 = dma.hbm_to_vmem [thread:$0]  %s0, 256, %s15, [#allocation3]
    $region5: #{tpu_custom_call.1} parent=1 // pred_fallthru
      _
    // Predicated region
    $region6: #{tpu_custom_call.1} parent=1 // pred_check
      _
    $region7: #{tpu_custom_call.1} parent=1 // pred_check_branch
      %19 = sbr.rel (0) target = $region9
    $region8: #{tpu_custom_call.1} parent=1 // pred_region
      %20 = dma.done [#allocation3], 256
    $region9: #{tpu_custom_call.1} parent=1 // pred_fallthru
      _
    %v21 = vld [vmem:[#allocation2] sm:$0xff]
    %v22 = vld [vmem:[#allocation2 + $0x8] sm:$0xff]
    %23 = vst [vmem:[#allocation5] sm:$0xff] %v21
    %24 = vst [vmem:[#allocation5 + $0x8] sm:$0xff] %v22
    // Predicated region
    $region10: #{tpu_custom_call.1} parent=1 // pred_check
      _
    $region11: #{tpu_custom_call.1} parent=1 // pred_check_branch
      %26 = sbr.rel (0) target = $region13
    $region12: #{tpu_custom_call.1} parent=1 // pred_region
      %s28 = ssub.s32 256, 256
      %29 = vsyncadd [#allocation4], %s28
      %s31 = sshll.u32 [#allocation5], 4
      %s32 = int_to_ptr.vmem [resolvable:$true] %s31
      %34 = dma.vmem_to_hbm [thread:$0]  %s32, 256, %s1, [#allocation4]
    $region13: #{tpu_custom_call.1} parent=1 // pred_fallthru
      _
    // Predicated region
    $region14: #{tpu_custom_call.1} parent=1 // pred_check
      _
    $region15: #{tpu_custom_call.1} parent=1 // pred_check_branch
      %36 = sbr.rel (0) target = $region17
    $region16: #{tpu_custom_call.1} parent=1 // pred_region
      %37 = dma.done [#allocation4], 256
    $region17: #{tpu_custom_call.1} parent=1 // pred_fallthru
      _
    %38 = vsyncpa [#allocation3], 1
    %39 = vsyncpa [#allocation4], 1

</llo_original>
